<compile_context>
chip_gen: v7x
topology: tpu7x:2x2x1
jax: 0.10.0
libtpu: 0.0.40
codegen_flags: <defaults>
</compile_context>

<pallas_src>
import numpy as np
import jax
import jax.numpy as jnp
from jax import lax
from jax.experimental import pallas as pl
from jax.experimental.pallas import tpu as pltpu  # noqa: F401  (TPU backend)

# Small synthetic sizes consistent with the module's Params.
# B=16 is chosen per the performance review so that B*G = 128 (lane-dense stores and
# full MXU column width); the module itself does not fix the batch size.
B = 16   # batch (graphs per call)
N = 8    # num_stats (graph nodes)
E = 16   # num_edges (rows of ef / columns of incidence)
C = 4    # local_cnn_dims
F = 6    # edge_feature_dims
H = 16   # decf_mlp_hidden[0]
G = 8    # gnn_dims[0]
BG = B * G                  # 128 : lane width of y1 / y2 / output
CBG = C * B * G             # 512 : lane width of x_rep / k_rep / prod
CONST_ROWS = 32             # E + N + 1 rounded up to a sublane multiple (8)


def decf_kernel(x_ref, const_ref, out_ref):
    f32 = jnp.float32

    # Free static views into the single constant slab.
    k_rep = const_ref[0:E, :]                    # (E, C*B*G)  hoisted edge-MLP kernel
    inc   = const_ref[E:E + N, 0:E]              # (N, E)      incidence matrix
    gcb   = const_ref[E + N:E + N + 1, 0:BG]     # (1, B*G)    gc bias, tiled over batch

    # Node -> edge projection for the whole batch in ONE dot, contracting the node
    # dimension of both operands (no materialized incidence^T):
    #   xe_rep[e, c*B*G + b*G + g] = sum_n inc[n, e] * x[b, n, c]
    xe_rep = lax.dot_general(
        inc, x_ref[...],
        dimension_numbers=(((0,), (0,)), ((), ())),
        preferred_element_type=f32)              # (E, C*B*G)

    # Per-edge kernel contraction: one VPU multiply ...
    prod = k_rep * xe_rep                        # (E, C*B*G)

    # ... then the sum over local channels c as 3 VPU adds over lane-tile-aligned
    # static slices (each slice is a multiple of 128 lanes -> free vreg selection).
    y1 = prod[:, 0:BG]
    for c in range(1, C):
        y1 = y1 + prod[:, c * BG:(c + 1) * BG]   # (E, B*G)

    # Edge -> node aggregation + gc (identity weight + bias) + ReLU.
    # Single unmasked lane-dense (8, 128) store.
    # TODO(synk): gc.weight is hard-coded identity (the module freezes it to eye); if a
    # checkpoint ever overwrites it, fold a (G, G) weight into one more constant dot.
    y2 = jnp.dot(inc, y1, preferred_element_type=f32)   # (N, B*G)
    out_ref[...] = jnp.maximum(y2 + gcb, 0.0)


def build_decf_forward(ef, w1, b1, w2, b2, inc, gc_bias):
    """One-time setup: hoists the parameter-only edge-feature MLP and packs all
    x-independent operands into a single lane-aligned constant slab.
    Returns a jitted forward(x: (B, N, C)) -> (B, N*G)."""
    # --- hoisted edge-feature MLP (depends only on parameters / buffers) -----------
    h = jnp.maximum(ef @ w1 + b1, 0.0)                               # (E, H)
    kflat = h @ w2 + b2                                              # (E, G*C), torch col layout g*C + c
    # Re-index + batch-replicate columns so kernel lane index = c*B*G + b*G + g.
    c_i = np.arange(C)[:, None, None]
    g_i = np.arange(G)[None, None, :]
    col_idx = np.broadcast_to(g_i * C + c_i, (C, B, G)).reshape(-1)  # (C*B*G,)
    k_rep = kflat[:, col_idx]                                        # (E, C*B*G)

    # --- single constant slab: [k_rep ; inc (lane-padded) ; gc bias ; zero pad] ----
    inc_pad = jnp.zeros((N, CBG), jnp.float32).at[:, :E].set(inc)
    gcb_pad = jnp.zeros((1, CBG), jnp.float32).at[0, :BG].set(jnp.tile(gc_bias, B))
    zpad = jnp.zeros((CONST_ROWS - (E + N + 1), CBG), jnp.float32)
    consts = jnp.concatenate([k_rep, inc_pad, gcb_pad, zpad], axis=0)  # (32, C*B*G)

    # No grid / no BlockSpecs: single invocation, whole tile-aligned arrays in VMEM,
    # exactly 2 input DMAs (x_rep + consts) and 1 lane-dense output DMA per call.
    call = pl.pallas_call(
        decf_kernel,
        out_shape=jax.ShapeDtypeStruct((N, BG), jnp.float32),
    )

    @jax.jit
    def forward(x):
        # Per-call layout glue: x_rep[n, c*B*G + b*G + g] = x[b, n, c]
        xt = jnp.transpose(x, (1, 2, 0))                              # (N, C, B)
        x_rep = jnp.broadcast_to(xt[..., None], (N, C, B, G)).reshape(N, CBG)
        y = call(x_rep, consts)                                       # (N, B*G) lane-packed
        # (N, B*G) -> (B, N*G): mirrors the torch module's trailing reshape.
        return jnp.transpose(y.reshape(N, B, G), (1, 0, 2)).reshape(B, N * G)

    return forward


def decf_reference(x, ef, w1, b1, w2, b2, inc, gc_bias):
    """Pure-JAX transcription of the PyTorch forward (torch column layout)."""
    h = jnp.maximum(ef @ w1 + b1, 0.0)
    kflat = h @ w2 + b2                               # (E, G*C), index = g*C + c
    k3 = kflat.reshape(E, G, C)
    xe = jnp.einsum('bnc,ne->bec', x, inc)            # (B, E, C)
    y1 = jnp.einsum('egc,bec->beg', k3, xe)           # (B, E, G)
    y2 = jnp.einsum('ne,beg->bng', inc, y1)           # (B, N, G)
    y = jnp.maximum(y2 + gc_bias, 0.0)                # gc: identity weight + bias
    return y.reshape(x.shape[0], -1)


if __name__ == "__main__":
    key = jax.random.PRNGKey(0)
    ks = jax.random.split(key, 8)

    # Deterministic synthetic parameters / buffers (stand-ins for the .npy loads).
    # TODO(synk): real module loads incidence / ef from .npy files; synthesized here.
    x       = jax.random.normal(ks[0], (B, N, C), jnp.float32)
    ef      = jax.random.normal(ks[1], (E, F), jnp.float32)            # already "transposed"
    inc     = jax.random.normal(ks[2], (N, E), jnp.float32)            # incidence matrix
    w1      = jax.random.normal(ks[3], (F, H), jnp.float32) * 0.1      # mlp Linear 1
    b1      = jax.random.normal(ks[4], (H,), jnp.float32) * 0.1
    w2      = jax.random.normal(ks[5], (H, C * G), jnp.float32) * 0.1  # mlp Linear 2 (torch col layout g*C+c)
    b2      = jax.random.normal(ks[6], (C * G,), jnp.float32) * 0.1
    gc_bias = jax.random.normal(ks[7], (G,), jnp.float32) * 0.1        # gc weight is frozen identity

    forward = build_decf_forward(ef, w1, b1, w2, b2, inc, gc_bias)
    out = jax.block_until_ready(forward(x))

    ref = decf_reference(x, ef, w1, b1, w2, b2, inc, gc_bias)
    assert out.shape == (B, N * G)
    np.testing.assert_allclose(np.asarray(out), np.asarray(ref), rtol=1e-5, atol=1e-5)

    print("KERNEL_OK")
</pallas_src>

<mosaic_0001>
module attributes {stable_mosaic.version = 11 : i64} {
  func.func @decf_kernel(%arg0: memref<8x512xf32, #tpu.memory_space<vmem>>, %arg1: memref<32x512xf32, #tpu.memory_space<vmem>>, %arg2: memref<8x128xf32, #tpu.memory_space<vmem>>) attributes {dimension_semantics = [], scalar_prefetch = 0 : i64, scratch_operands = 0 : i64, tpu.core_type = #tpu.core_type<tc>} {
    %c0 = arith.constant 0 : index
    %c0_0 = arith.constant 0 : index
    %0 = vector.load %arg1[%c0, %c0_0] : memref<32x512xf32, #tpu.memory_space<vmem>>, vector<16x512xf32>
    %c16 = arith.constant 16 : index
    %c0_1 = arith.constant 0 : index
    %1 = vector.load %arg1[%c16, %c0_1] : memref<32x512xf32, #tpu.memory_space<vmem>>, vector<8x16xf32>
    %c24 = arith.constant 24 : index
    %c0_2 = arith.constant 0 : index
    %2 = vector.load %arg1[%c24, %c0_2] : memref<32x512xf32, #tpu.memory_space<vmem>>, vector<1x128xf32>
    %c0_3 = arith.constant 0 : index
    %c0_4 = arith.constant 0 : index
    %3 = vector.load %arg0[%c0_3, %c0_4] : memref<8x512xf32, #tpu.memory_space<vmem>>, vector<8x512xf32>
    %cst = arith.constant dense<0.000000e+00> : vector<16x512xf32>
    %4 = tpu.matmul %1, %3, %cst {dimension_numbers = #tpu.dot_dimension_numbers<[0], [0], [1], [1], [0, 1, 1, 1], [], []>} : vector<8x16xf32>, vector<8x512xf32>, vector<16x512xf32> -> vector<16x512xf32>
    %5 = arith.mulf %0, %4 : vector<16x512xf32>
    %6 = vector.extract_strided_slice %5 {offsets = [0, 0], sizes = [16, 128], strides = [1, 1]} : vector<16x512xf32> to vector<16x128xf32>
    %7 = vector.extract_strided_slice %5 {offsets = [0, 128], sizes = [16, 128], strides = [1, 1]} : vector<16x512xf32> to vector<16x128xf32>
    %8 = arith.addf %6, %7 : vector<16x128xf32>
    %9 = vector.extract_strided_slice %5 {offsets = [0, 256], sizes = [16, 128], strides = [1, 1]} : vector<16x512xf32> to vector<16x128xf32>
    %10 = arith.addf %8, %9 : vector<16x128xf32>
    %11 = vector.extract_strided_slice %5 {offsets = [0, 384], sizes = [16, 128], strides = [1, 1]} : vector<16x512xf32> to vector<16x128xf32>
    %12 = arith.addf %10, %11 : vector<16x128xf32>
    %cst_5 = arith.constant dense<0.000000e+00> : vector<8x128xf32>
    %13 = tpu.matmul %1, %12, %cst_5 {dimension_numbers = #tpu.dot_dimension_numbers<[1], [0], [0], [1], [0, 0, 1, 1], [], []>} : vector<8x16xf32>, vector<16x128xf32>, vector<8x128xf32> -> vector<8x128xf32>
    %14 = vector.broadcast %2 : vector<1x128xf32> to vector<8x128xf32>
    %15 = arith.addf %13, %14 : vector<8x128xf32>
    %cst_6 = arith.constant 0.000000e+00 : f32
    %16 = vector.broadcast %cst_6 : f32 to vector<8x128xf32>
    %17 = arith.maximumf %15, %16 : vector<8x128xf32>
    %c0_7 = arith.constant 0 : index
    %c0_8 = arith.constant 0 : index
    %18 = vector.load %arg2[%c0_7, %c0_8] : memref<8x128xf32, #tpu.memory_space<vmem>>, vector<8x128xf32>
    tpu.vector_store %arg2[%c0_7, %c0_8], %17 {strides = array<i32>} : memref<8x128xf32, #tpu.memory_space<vmem>>, vector<8x128xf32>,
    return
  }
}

</mosaic_0001>

<llo_original>
// kernel: forward.1
$region0: #{forward.1}
  #allocation0 [shape = 'u32[]', space=smem, size = 0x4, offset = 0x4, fixed_abs, tag = 'smem constant byte address 0x4 - core index']
  #allocation1 [shape = 'u32[144,128]{1,0:T(1,128)}', space=vmem, size = 0x12000, scoped, tag = 'internal scratch']
  %s0 = inlined_call_operand.vmem [shape: f32[8,512], index: 0, kind: input, shape index: {}]
  %s1 = inlined_call_operand.vmem [shape: f32[32,512], index: 1, kind: input, shape index: {}]
  %s2 = inlined_call_operand.vmem [shape: f32[8,128], index: 2, kind: output, shape index: {}]
  %s3 = sld [smem:[#allocation0]]
  $region18: #{forward.1} parent=0
    _
  %s5 = ssub.s32 1, %s3
  %s6 = scalar_select 0, %s5, %s3
  // Predicated region
  $region2: #{forward.1} parent=0 // pred_check
    _
  $region3: #{forward.1} parent=0 // pred_check_branch
    %8 = sbr.rel (0) target = $region5
  $region4: #{forward.1} parent=0 // pred_region
    _
  $region5: #{forward.1} parent=0 // pred_fallthru
    _
  // Predicated region
  $region6: #{forward.1} parent=0 // pred_check
    _
  $region7: #{forward.1} parent=0 // pred_check_branch
    %10 = sbr.rel (0) target = $region9
  $region8: #{forward.1} parent=0 // pred_region
    _
  $region9: #{forward.1} parent=0 // pred_fallthru
    _
  %v11 = vld [vmem:[%s1] sm:$0xff]
  %v12 = vld [vmem:[%s1 + $0x8] sm:$0xff]
  %v13 = vld [vmem:[%s1 + $0x10] sm:$0xff]
  %v14 = vld [vmem:[%s1 + $0x18] sm:$0xff]
  %v15 = vld [vmem:[%s1 + $0x20] sm:$0xff]
  %v16 = vld [vmem:[%s1 + $0x28] sm:$0xff]
  %v17 = vld [vmem:[%s1 + $0x30] sm:$0xff]
  %v18 = vld [vmem:[%s1 + $0x38] sm:$0xff]
  %v19 = vld [vmem:[%s1 + $0x40] sm:$0xff]
  %v20 = vld [vmem:[%s1 + $0x60] ss:$0 sm:$0xff]
  %v21 = vld [vmem:[%s0] sm:$0xff]
  %v22 = vld [vmem:[%s0 + $0x8] sm:$0xff]
  %v23 = vld [vmem:[%s0 + $0x10] sm:$0xff]
  %v24 = vld [vmem:[%s0 + $0x18] sm:$0xff]
  %25 = vxpose.xlu0.b32.start [1/16] %v19, 128
  %26 = vxpose.xlu0.b32.cont [2/16] 0.0, 128
  %27 = vxpose.xlu0.b32.cont [3/16] 0.0, 128
  %28 = vxpose.xlu0.b32.cont [4/16] 0.0, 128
  %29 = vxpose.xlu0.b32.cont [5/16] 0.0, 128
  %30 = vxpose.xlu0.b32.cont [6/16] 0.0, 128
  %31 = vxpose.xlu0.b32.cont [7/16] 0.0, 128
  %32 = vxpose.xlu0.b32.cont [8/16] 0.0, 128
  %33 = vxpose.xlu0.b32.cont [9/16] 0.0, 128
  %34 = vxpose.xlu0.b32.cont [10/16] 0.0, 128
  %35 = vxpose.xlu0.b32.cont [11/16] 0.0, 128
  %36 = vxpose.xlu0.b32.cont [12/16] 0.0, 128
  %37 = vxpose.xlu0.b32.cont [13/16] 0.0, 128
  %38 = vxpose.xlu0.b32.cont [14/16] 0.0, 128
  %39 = vxpose.xlu0.b32.cont [15/16] 0.0, 128
  %40 = vxpose.xlu0.b32.end [16/16] 0.0, 128
  %v41 = vpop.trf.xlu0
  %v42 = vpop.trf.xlu0
  %v43 = vpop.trf.xlu0
  %v44 = vpop.trf.xlu0
  %v45 = vpop.trf.xlu0
  %v46 = vpop.trf.xlu0
  %v47 = vpop.trf.xlu0
  %v48 = vpop.trf.xlu0
  %v49 = vpop.trf.xlu0
  %v50 = vpop.trf.xlu0
  %v51 = vpop.trf.xlu0
  %v52 = vpop.trf.xlu0
  %v53 = vpop.trf.xlu0
  %v54 = vpop.trf.xlu0
  %v55 = vpop.trf.xlu0
  %v56 = vpop.trf.xlu0
  %vm57 = vcmask 64512
  %v59 = vsel %vm57, %v41, 0
  %v62 = vsel %vm57, %v42, 0
  %64 = vmatprep.subr.mxu0 %v22
  %65 = vmatpush1.msra.mxu0 %v21
  %66 = vmatprep.subr.mxu0 0.0
  %67 = vmatpush1.msra.mxu0 0.0
  %68 = vmatprep.subr.mxu0 0.0
  %69 = vmatpush1.msra.mxu0 0.0
  %70 = vmatprep.subr.mxu0 0.0
  %71 = vmatpush1.msra.mxu0 0.0
  %72 = vmatprep.subr.mxu0 0.0
  %73 = vmatpush1.msra.mxu0 0.0
  %74 = vmatprep.subr.mxu0 0.0
  %75 = vmatpush1.msra.mxu0 0.0
  %76 = vmatprep.subr.mxu0 0.0
  %77 = vmatpush1.msra.mxu0 0.0
  %78 = vmatprep.subr.mxu0 0.0
  %79 = vmatpush1.msra.mxu0 0.0
  %80 = vmatprep.subr.mxu0 0.0
  %81 = vmatpush1.msra.mxu0 0.0
  %82 = vmatprep.subr.mxu0 0.0
  %83 = vmatpush1.msra.mxu0 0.0
  %84 = vmatprep.subr.mxu0 0.0
  %85 = vmatpush1.msra.mxu0 0.0
  %86 = vmatprep.subr.mxu0 0.0
  %87 = vmatpush1.msra.mxu0 0.0
  %88 = vmatprep.subr.mxu0 0.0
  %89 = vmatpush1.msra.mxu0 0.0
  %90 = vmatprep.subr.mxu0 0.0
  %91 = vmatpush1.msra.mxu0 0.0
  %92 = vmatprep.subr.mxu0 0.0
  %93 = vmatpush1.msra.mxu0 0.0
  %94 = vmatprep.subr.mxu0 0.0
  %95 = vmatpush1.msra.mxu0 0.0
  %96 = vmatprep.subr.mxu0 0.0
  %97 = vmatpush1.msra.mxu0 0.0
  %98 = vmatprep.subr.mxu0 0.0
  %99 = vmatpush1.msra.mxu0 0.0
  %100 = vmatprep.subr.mxu0 0.0
  %101 = vmatpush1.msra.mxu0 0.0
  %102 = vmatprep.subr.mxu0 0.0
  %103 = vmatpush1.msra.mxu0 0.0
  %104 = vmatprep.subr.mxu0 0.0
  %105 = vmatpush1.msra.mxu0 0.0
  %106 = vmatprep.subr.mxu0 0.0
  %107 = vmatpush1.msra.mxu0 0.0
  %108 = vmatprep.subr.mxu0 0.0
  %109 = vmatpush1.msra.mxu0 0.0
  %110 = vmatprep.subr.mxu0 0.0
  %111 = vmatpush1.msra.mxu0 0.0
  %112 = vmatprep.subr.mxu0 0.0
  %113 = vmatpush1.msra.mxu0 0.0
  %114 = vmatprep.subr.mxu0 0.0
  %115 = vmatpush1.msra.mxu0 0.0
  %116 = vmatprep.subr.mxu0 0.0
  %117 = vmatpush1.msra.mxu0 0.0
  %118 = vmatprep.subr.mxu0 0.0
  %119 = vmatpush1.msra.mxu0 0.0
  %120 = vmatprep.subr.mxu0 0.0
  %121 = vmatpush1.msra.mxu0 0.0
  %122 = vmatprep.subr.mxu0 0.0
  %123 = vmatpush1.msra.mxu0 0.0
  %124 = vmatprep.subr.mxu0 0.0
  %125 = vmatpush1.msra.mxu0 0.0
  %126 = vmatprep.subr.mxu0 0.0
  %127 = vmatpush1.msra.mxu0 0.0
  %128 = vmatprep.mubr.f32.mxu0 0.0
  %129 = vmatmul.mubr.f32.gmra.mrb[0].mxu0 %v59
  %v130 = vpop.f32.mrb[0].mxu0
  %v131 = vadd.f32 0.0, %v130
  %v132 = vpop.f32.mrb[0].mxu0
  %v133 = vadd.f32 0.0, %v132
  %134 = vmatprep.mubr.f32.mxu0 0.0
  %135 = vmatmul.mubr.f32.gmra.mrb[0].mxu0 %v62
  %v136 = vpop.f32.mrb[0].mxu0
  %v137 = vadd.f32 0.0, %v136
  %v138 = vpop.f32.mrb[0].mxu0
  %v139 = vadd.f32 0.0, %v138
  %140 = vdwg.mxu0
  %141 = vmatprep.subr.mxu0 %v24
  %142 = vmatpush1.msra.mxu0 %v23
  %143 = vmatprep.subr.mxu0 0.0
  %144 = vmatpush1.msra.mxu0 0.0
  %145 = vmatprep.subr.mxu0 0.0
  %146 = vmatpush1.msra.mxu0 0.0
  %147 = vmatprep.subr.mxu0 0.0
  %148 = vmatpush1.msra.mxu0 0.0
  %149 = vmatprep.subr.mxu0 0.0
  %150 = vmatpush1.msra.mxu0 0.0
  %151 = vmatprep.subr.mxu0 0.0
  %152 = vmatpush1.msra.mxu0 0.0
  %153 = vmatprep.subr.mxu0 0.0
  %154 = vmatpush1.msra.mxu0 0.0
  %155 = vmatprep.subr.mxu0 0.0
  %156 = vmatpush1.msra.mxu0 0.0
  %157 = vmatprep.subr.mxu0 0.0
  %158 = vmatpush1.msra.mxu0 0.0
  %159 = vmatprep.subr.mxu0 0.0
  %160 = vmatpush1.msra.mxu0 0.0
  %161 = vmatprep.subr.mxu0 0.0
  %162 = vmatpush1.msra.mxu0 0.0
  %163 = vmatprep.subr.mxu0 0.0
  %164 = vmatpush1.msra.mxu0 0.0
  %165 = vmatprep.subr.mxu0 0.0
  %166 = vmatpush1.msra.mxu0 0.0
  %167 = vmatprep.subr.mxu0 0.0
  %168 = vmatpush1.msra.mxu0 0.0
  %169 = vmatprep.subr.mxu0 0.0
  %170 = vmatpush1.msra.mxu0 0.0
  %171 = vmatprep.subr.mxu0 0.0
  %172 = vmatpush1.msra.mxu0 0.0
  %173 = vmatprep.subr.mxu0 0.0
  %174 = vmatpush1.msra.mxu0 0.0
  %175 = vmatprep.subr.mxu0 0.0
  %176 = vmatpush1.msra.mxu0 0.0
  %177 = vmatprep.subr.mxu0 0.0
  %178 = vmatpush1.msra.mxu0 0.0
  %179 = vmatprep.subr.mxu0 0.0
  %180 = vmatpush1.msra.mxu0 0.0
  %181 = vmatprep.subr.mxu0 0.0
  %182 = vmatpush1.msra.mxu0 0.0
  %183 = vmatprep.subr.mxu0 0.0
  %184 = vmatpush1.msra.mxu0 0.0
  %185 = vmatprep.subr.mxu0 0.0
  %186 = vmatpush1.msra.mxu0 0.0
  %187 = vmatprep.subr.mxu0 0.0
  %188 = vmatpush1.msra.mxu0 0.0
  %189 = vmatprep.subr.mxu0 0.0
  %190 = vmatpush1.msra.mxu0 0.0
  %191 = vmatprep.subr.mxu0 0.0
  %192 = vmatpush1.msra.mxu0 0.0
  %193 = vmatprep.subr.mxu0 0.0
  %194 = vmatpush1.msra.mxu0 0.0
  %195 = vmatprep.subr.mxu0 0.0
  %196 = vmatpush1.msra.mxu0 0.0
  %197 = vmatprep.subr.mxu0 0.0
  %198 = vmatpush1.msra.mxu0 0.0
  %199 = vmatprep.subr.mxu0 0.0
  %200 = vmatpush1.msra.mxu0 0.0
  %201 = vmatprep.subr.mxu0 0.0
  %202 = vmatpush1.msra.mxu0 0.0
  %203 = vmatprep.subr.mxu0 0.0
  %204 = vmatpush1.msra.mxu0 0.0
  %205 = vmatprep.mubr.f32.mxu0 0.0
  %206 = vmatmul.mubr.f32.gmra.mrb[0].mxu0 %v59
  %v207 = vpop.f32.mrb[0].mxu0
  %v208 = vadd.f32 0.0, %v207
  %v209 = vpop.f32.mrb[0].mxu0
  %v210 = vadd.f32 0.0, %v209
  %211 = vmatprep.mubr.f32.mxu0 0.0
  %212 = vmatmul.mubr.f32.gmra.mrb[0].mxu0 %v62
  %v213 = vpop.f32.mrb[0].mxu0
  %v214 = vadd.f32 0.0, %v213
  %v215 = vpop.f32.mrb[0].mxu0
  %v216 = vadd.f32 0.0, %v215
  %217 = vdwg.mxu0
  %v218 = vmul.f32 %v11, %v131
  %v219 = vmul.f32 %v12, %v133
  %v220 = vmul.f32 %v13, %v208
  %v221 = vmul.f32 %v14, %v210
  %v222 = vmul.f32 %v15, %v137
  %v223 = vmul.f32 %v16, %v139
  %v224 = vmul.f32 %v17, %v214
  %v225 = vmul.f32 %v18, %v216
  %v226 = vadd.f32 %v218, %v219
  %v227 = vadd.f32 %v222, %v223
  %v228 = vadd.f32 %v226, %v220
  %v229 = vadd.f32 %v227, %v224
  %v230 = vadd.f32 %v228, %v221
  %v231 = vadd.f32 %v229, %v225
  %vm232 = vcmask 130048
  %v234 = vsel %vm232, %v19, 0
  %236 = vmatprep.subr.mxu0 0.0
  %237 = vmatpush1.msra.mxu0 %v230
  %238 = vmatprep.subr.mxu0 0.0
  %239 = vmatpush1.msra.mxu0 %v231
  %240 = vmatprep.subr.mxu0 0.0
  %241 = vmatpush1.msra.mxu0 0.0
  %242 = vmatprep.subr.mxu0 0.0
  %243 = vmatpush1.msra.mxu0 0.0
  %244 = vmatprep.subr.mxu0 0.0
  %245 = vmatpush1.msra.mxu0 0.0
  %246 = vmatprep.subr.mxu0 0.0
  %247 = vmatpush1.msra.mxu0 0.0
  %248 = vmatprep.subr.mxu0 0.0
  %249 = vmatpush1.msra.mxu0 0.0
  %250 = vmatprep.subr.mxu0 0.0
  %251 = vmatpush1.msra.mxu0 0.0
  %252 = vmatprep.subr.mxu0 0.0
  %253 = vmatpush1.msra.mxu0 0.0
  %254 = vmatprep.subr.mxu0 0.0
  %255 = vmatpush1.msra.mxu0 0.0
  %256 = vmatprep.subr.mxu0 0.0
  %257 = vmatpush1.msra.mxu0 0.0
  %258 = vmatprep.subr.mxu0 0.0
  %259 = vmatpush1.msra.mxu0 0.0
  %260 = vmatprep.subr.mxu0 0.0
  %261 = vmatpush1.msra.mxu0 0.0
  %262 = vmatprep.subr.mxu0 0.0
  %263 = vmatpush1.msra.mxu0 0.0
  %264 = vmatprep.subr.mxu0 0.0
  %265 = vmatpush1.msra.mxu0 0.0
  %266 = vmatprep.subr.mxu0 0.0
  %267 = vmatpush1.msra.mxu0 0.0
  %268 = vmatprep.subr.mxu0 0.0
  %269 = vmatpush1.msra.mxu0 0.0
  %270 = vmatprep.subr.mxu0 0.0
  %271 = vmatpush1.msra.mxu0 0.0
  %272 = vmatprep.subr.mxu0 0.0
  %273 = vmatpush1.msra.mxu0 0.0
  %274 = vmatprep.subr.mxu0 0.0
  %275 = vmatpush1.msra.mxu0 0.0
  %276 = vmatprep.subr.mxu0 0.0
  %277 = vmatpush1.msra.mxu0 0.0
  %278 = vmatprep.subr.mxu0 0.0
  %279 = vmatpush1.msra.mxu0 0.0
  %280 = vmatprep.subr.mxu0 0.0
  %281 = vmatpush1.msra.mxu0 0.0
  %282 = vmatprep.subr.mxu0 0.0
  %283 = vmatpush1.msra.mxu0 0.0
  %284 = vmatprep.subr.mxu0 0.0
  %285 = vmatpush1.msra.mxu0 0.0
  %286 = vmatprep.subr.mxu0 0.0
  %287 = vmatpush1.msra.mxu0 0.0
  %288 = vmatprep.subr.mxu0 0.0
  %289 = vmatpush1.msra.mxu0 0.0
  %290 = vmatprep.subr.mxu0 0.0
  %291 = vmatpush1.msra.mxu0 0.0
  %292 = vmatprep.subr.mxu0 0.0
  %293 = vmatpush1.msra.mxu0 0.0
  %294 = vmatprep.subr.mxu0 0.0
  %295 = vmatpush1.msra.mxu0 0.0
  %296 = vmatprep.subr.mxu0 0.0
  %297 = vmatpush1.msra.mxu0 0.0
  %298 = vmatprep.subr.mxu0 0.0
  %299 = vmatpush1.msra.mxu0 0.0
  %300 = vmatprep.mubr.f32.mxu0 0.0
  %301 = vmatmul.mubr.f32.gmra.mrb[0].mxu0 %v234
  %v302 = vpop.f32.mrb[0].mxu0
  %v303 = vadd.f32 %v20, %v302
  %v304 = vpop.f32.mrb[0].mxu0
  %305 = vdwg.mxu0
  %v306 = vmax.f32 %v303, 0.0
  %307 = vst [vmem:[%s2] sm:$0xff] %v306
  // Predicated region
  $region10: #{forward.1} parent=0 // pred_check
    _
  $region11: #{forward.1} parent=0 // pred_check_branch
    %309 = sbr.rel (0) target = $region13
  $region12: #{forward.1} parent=0 // pred_region
    _
  $region13: #{forward.1} parent=0 // pred_fallthru
    _
  // Predicated region
  $region14: #{forward.1} parent=0 // pred_check
    _
  $region15: #{forward.1} parent=0 // pred_check_branch
    %311 = sbr.rel (0) target = $region17
  $region16: #{forward.1} parent=0 // pred_region
    _
  $region17: #{forward.1} parent=0 // pred_fallthru
    _

</llo_original>
